<compile_context>
chip_gen: v7x
topology: tpu7x:2x2x1
jax: 0.10.0
libtpu: 0.0.40
codegen_flags: <defaults>
</compile_context>

<pallas_src>
import functools

import jax
import jax.numpy as jnp
from jax.experimental import pallas as pl
from jax.experimental.pallas import tpu as pltpu

INPUT_SIZE = 27
HIDDEN_SIZE = 50
LANE = 128                 # batch-tile granule (lane width)
DEFAULT_BATCH_TILE = 2048  # v5e-safe; ~5-6 MiB live VMEM at this tile

# Contract both operands' last dim -> A @ B^T (same as q @ k^T in the
# reference flash-attention TPU kernel), MXU-native.
_TRANS_B_DIMS = (((1,), (1,)), ((), ()))


def _cdiv(a, b):
    return (a + b - 1) // b


def _round_up(a, b):
    return _cdiv(a, b) * b


def _sigmoid(x):
    # One EUP push (tanh) per vreg instead of exp + reciprocal, and exact.
    return 0.5 * (jnp.tanh(0.5 * x) + 1.0)


def mlp_kernel(x_ref, w1_ref, b1_ref, w2_ref, b2_ref, w3_ref, b3_ref, o_ref):
    # x tile: (TB, 27) f32, cast to bf16 in-kernel (the f32 input DMA hides
    # under compute; no separate wrapper cast pass over x).
    x_bf16 = x_ref[...].astype(jnp.bfloat16)

    # fc1: h1^T = W1 @ x^T as an NT matmul -> (50, TB).  Batch lands on lanes,
    # so all downstream elementwise work and the output store are lane-dense.
    h1t = jax.lax.dot_general(w1_ref[...], x_bf16, _TRANS_B_DIMS,
                              preferred_element_type=jnp.float32)
    a1t = _sigmoid(h1t + b1_ref[...])

    # fc2: W2 @ a1^T -> (50, TB), canonical bf16 MXU matmul, f32 accumulate.
    h2t = jnp.dot(w2_ref[...], a1t.astype(jnp.bfloat16),
                  preferred_element_type=jnp.float32)
    a2t = jnp.maximum(h2t + b2_ref[...], 0.0)

    # fc3: (8, 50) @ (50, TB) on the MXU (w3 zero-padded to 8 rows; row 0 is
    # the real output).  Kept in f32: exact final layer, no extra casts, and
    # no cross-lane reduce competing with vmatmul for the vex slots.
    h3t = jnp.dot(w3_ref[...], a2t, preferred_element_type=jnp.float32)
    o_ref[...] = _sigmoid(h3t[0:1, :] + b3_ref[...]).astype(o_ref.dtype)


@functools.partial(jax.jit, static_argnames=("block_batch",))
def pytorch_mlp_forward(x, params, *, block_batch=DEFAULT_BATCH_TILE):
    """x: (B, 27) float32 -> (B, 1) float32."""
    w1, b1, w2, b2, w3, b3 = params          # PyTorch layout: w is (out, in)
    B = x.shape[0]

    # Remainder-friendly, balanced tiling on a 128-lane granule.  Force >= 2
    # grid steps for larger batches so both v7x TensorCores get work.
    num_tiles = _cdiv(B, block_batch)
    if num_tiles == 1 and B > 2 * LANE:
        num_tiles = 2
    tb = _round_up(_cdiv(B, num_tiles), LANE)
    b_pad = num_tiles * tb
    if b_pad != B:
        x = jnp.pad(x, ((0, b_pad - B), (0, 0)))

    # Operand prep (all tiny; x itself is NOT touched in the wrapper).
    w1_bf16 = w1.astype(jnp.bfloat16)                       # (50, 27)
    w2_bf16 = w2.astype(jnp.bfloat16)                       # (50, 50)
    w3_pad = jnp.zeros((8, HIDDEN_SIZE), jnp.float32).at[0].set(w3[0])
    b1_col = b1.reshape(HIDDEN_SIZE, 1)
    b2_col = b2.reshape(HIDDEN_SIZE, 1)
    b3_2d = b3.reshape(1, 1)

    const = lambda i: (0, 0)   # weights/biases VMEM-resident across grid steps
    in_specs = [
        pl.BlockSpec((tb, INPUT_SIZE), lambda i: (i, 0)),        # x tile (f32)
        pl.BlockSpec((HIDDEN_SIZE, INPUT_SIZE), const),          # w1 (bf16)
        pl.BlockSpec((HIDDEN_SIZE, 1), const),                   # b1 column
        pl.BlockSpec((HIDDEN_SIZE, HIDDEN_SIZE), const),         # w2 (bf16)
        pl.BlockSpec((HIDDEN_SIZE, 1), const),                   # b2 column
        pl.BlockSpec((8, HIDDEN_SIZE), const),                   # w3 (padded)
        pl.BlockSpec((1, 1), const),                             # b3
    ]
    # Lane-dense output: one (1, TB) slab per grid step.
    out_specs = pl.BlockSpec((1, tb), lambda i: (0, i))

    cost = pl.CostEstimate(
        flops=2 * b_pad * (INPUT_SIZE * HIDDEN_SIZE
                           + HIDDEN_SIZE * HIDDEN_SIZE
                           + HIDDEN_SIZE),
        transcendentals=b_pad * (HIDDEN_SIZE + 1),   # one tanh per sigmoid
        bytes_accessed=b_pad * (INPUT_SIZE * 4 + 4)
        + w1_bf16.size * 2 + w2_bf16.size * 2
        + (w3_pad.size + b1.size + b2.size + b3.size) * 4,
    )

    out = pl.pallas_call(
        mlp_kernel,
        out_shape=jax.ShapeDtypeStruct((1, b_pad), jnp.float32),
        grid=(num_tiles,),
        in_specs=in_specs,
        out_specs=out_specs,
        compiler_params=pltpu.CompilerParams(
            dimension_semantics=("parallel",),
            vmem_limit_bytes=32 * 1024 * 1024,
        ),
        cost_estimate=cost,
    )(x, w1_bf16, b1_col, w2_bf16, b2_col, w3_pad, b3_2d)

    # (1, b_pad) row-major -> (b_pad, 1) is a free reshape; drop padded rows.
    return out.reshape(b_pad, 1)[:B]


def init_params(key):
    """Deterministic init mimicking torch.nn.Linear's U(-1/sqrt(fan_in), +)."""
    def linear(key, fan_in, fan_out):
        kw, kb = jax.random.split(key)
        bound = 1.0 / jnp.sqrt(jnp.float32(fan_in))
        # PyTorch layout: weight (out, in), bias (out,)
        w = jax.random.uniform(kw, (fan_out, fan_in), jnp.float32, -bound, bound)
        b = jax.random.uniform(kb, (fan_out,), jnp.float32, -bound, bound)
        return w, b

    k1, k2, k3 = jax.random.split(key, 3)
    w1, b1 = linear(k1, INPUT_SIZE, HIDDEN_SIZE)   # fc1: 27 -> 50
    w2, b2 = linear(k2, HIDDEN_SIZE, HIDDEN_SIZE)  # fc2: 50 -> 50
    w3, b3 = linear(k3, HIDDEN_SIZE, 1)            # fc3: 50 -> 1
    return (w1, b1, w2, b2, w3, b3)


def reference_forward(x, params):
    w1, b1, w2, b2, w3, b3 = params
    a1 = jax.nn.sigmoid(x @ w1.T + b1)
    a2 = jax.nn.relu(a1 @ w2.T + b2)
    return jax.nn.sigmoid(a2 @ w3.T + b3)


if __name__ == "__main__":
    key = jax.random.PRNGKey(0)
    k_params, k_x = jax.random.split(key)

    params = init_params(k_params)
    x = jax.random.normal(k_x, (8, INPUT_SIZE), dtype=jnp.float32)

    out = jax.block_until_ready(pytorch_mlp_forward(x, params))
    ref = reference_forward(x, params)

    assert out.shape == (8, 1), out.shape
    # bf16 MXU operands (fc1/fc2) with f32 accumulation; activations and fc3
    # are exact f32 -> comfortably within 2e-2 of the f32 reference.
    assert jnp.allclose(out, ref, atol=2e-2, rtol=2e-2), (
        f"max abs err {jnp.max(jnp.abs(out - ref))}"
    )
    print("KERNEL_OK")
</pallas_src>

<mosaic_0001>
module attributes {stable_mosaic.version = 11 : i64} {
  func.func @mlp_kernel(%arg0: i32, %arg1: memref<128x27xf32, #tpu.memory_space<vmem>>, %arg2: memref<50x27xbf16, #tpu.memory_space<vmem>>, %arg3: memref<50x1xf32, #tpu.memory_space<vmem>>, %arg4: memref<50x50xbf16, #tpu.memory_space<vmem>>, %arg5: memref<50x1xf32, #tpu.memory_space<vmem>>, %arg6: memref<8x50xf32, #tpu.memory_space<vmem>>, %arg7: memref<1x1xf32, #tpu.memory_space<vmem>>, %arg8: memref<1x128xf32, #tpu.memory_space<vmem>>) attributes {dimension_semantics = [#tpu.dimension_semantics<parallel>], iteration_bounds = array<i64: 1>, scalar_prefetch = 0 : i64, scratch_operands = 0 : i64, tpu.core_type = #tpu.core_type<tc>, window_params = [{transform_indices = @transform_0, window_bounds = array<i64: 128, 27>}, {pipeline_mode = #tpu.pipeline_mode<synchronous>, transform_indices = @transform_1, window_bounds = array<i64: 50, 27>}, {pipeline_mode = #tpu.pipeline_mode<synchronous>, transform_indices = @transform_2, window_bounds = array<i64: 50, 1>}, {pipeline_mode = #tpu.pipeline_mode<synchronous>, transform_indices = @transform_3, window_bounds = array<i64: 50, 50>}, {pipeline_mode = #tpu.pipeline_mode<synchronous>, transform_indices = @transform_4, window_bounds = array<i64: 50, 1>}, {pipeline_mode = #tpu.pipeline_mode<synchronous>, transform_indices = @transform_5, window_bounds = array<i64: 8, 50>}, {pipeline_mode = #tpu.pipeline_mode<synchronous>, transform_indices = @transform_6, window_bounds = array<i64: 1, 1>}, {transform_indices = @transform_7, window_bounds = array<i64: 1, 128>}]} {
    %c0 = arith.constant 0 : index
    %c0_0 = arith.constant 0 : index
    %0 = vector.load %arg1[%c0, %c0_0] : memref<128x27xf32, #tpu.memory_space<vmem>>, vector<128x27xf32>
    %1 = arith.truncf %0 : vector<128x27xf32> to vector<128x27xbf16>
    %c0_1 = arith.constant 0 : index
    %c0_2 = arith.constant 0 : index
    %2 = vector.load %arg2[%c0_1, %c0_2] : memref<50x27xbf16, #tpu.memory_space<vmem>>, vector<50x27xbf16>
    %cst = arith.constant dense<0.000000e+00> : vector<50x128xf32>
    %3 = tpu.matmul %2, %1, %cst {dimension_numbers = #tpu.dot_dimension_numbers<[1], [1], [0], [0], [0, 0, 1, 0], [], []>} : vector<50x27xbf16>, vector<128x27xbf16>, vector<50x128xf32> -> vector<50x128xf32>
    %c0_3 = arith.constant 0 : index
    %c0_4 = arith.constant 0 : index
    %4 = vector.load %arg3[%c0_3, %c0_4] : memref<50x1xf32, #tpu.memory_space<vmem>>, vector<50x1xf32>
    %5 = vector.broadcast %4 : vector<50x1xf32> to vector<50x128xf32>
    %6 = arith.addf %3, %5 : vector<50x128xf32>
    %cst_5 = arith.constant 5.000000e-01 : f32
    %7 = vector.broadcast %cst_5 : f32 to vector<50x128xf32>
    %8 = arith.mulf %7, %6 : vector<50x128xf32>
    %9 = math.tanh %8 : vector<50x128xf32>
    %cst_6 = arith.constant 1.000000e+00 : f32
    %10 = vector.broadcast %cst_6 : f32 to vector<50x128xf32>
    %11 = arith.addf %9, %10 : vector<50x128xf32>
    %cst_7 = arith.constant 5.000000e-01 : f32
    %12 = vector.broadcast %cst_7 : f32 to vector<50x128xf32>
    %13 = arith.mulf %12, %11 : vector<50x128xf32>
    %c0_8 = arith.constant 0 : index
    %c0_9 = arith.constant 0 : index
    %14 = vector.load %arg4[%c0_8, %c0_9] : memref<50x50xbf16, #tpu.memory_space<vmem>>, vector<50x50xbf16>
    %15 = arith.truncf %13 : vector<50x128xf32> to vector<50x128xbf16>
    %cst_10 = arith.constant dense<0.000000e+00> : vector<50x128xf32>
    %16 = tpu.matmul %14, %15, %cst_10 {dimension_numbers = #tpu.dot_dimension_numbers<[1], [0], [0], [1], [0, 0, 1, 1], [], []>} : vector<50x50xbf16>, vector<50x128xbf16>, vector<50x128xf32> -> vector<50x128xf32>
    %c0_11 = arith.constant 0 : index
    %c0_12 = arith.constant 0 : index
    %17 = vector.load %arg5[%c0_11, %c0_12] : memref<50x1xf32, #tpu.memory_space<vmem>>, vector<50x1xf32>
    %18 = vector.broadcast %17 : vector<50x1xf32> to vector<50x128xf32>
    %19 = arith.addf %16, %18 : vector<50x128xf32>
    %cst_13 = arith.constant 0.000000e+00 : f32
    %20 = vector.broadcast %cst_13 : f32 to vector<50x128xf32>
    %21 = arith.maximumf %19, %20 : vector<50x128xf32>
    %c0_14 = arith.constant 0 : index
    %c0_15 = arith.constant 0 : index
    %22 = vector.load %arg6[%c0_14, %c0_15] : memref<8x50xf32, #tpu.memory_space<vmem>>, vector<8x50xf32>
    %cst_16 = arith.constant dense<0.000000e+00> : vector<8x128xf32>
    %23 = tpu.matmul %22, %21, %cst_16 {dimension_numbers = #tpu.dot_dimension_numbers<[1], [0], [0], [1], [0, 0, 1, 1], [], []>} : vector<8x50xf32>, vector<50x128xf32>, vector<8x128xf32> -> vector<8x128xf32>
    %24 = vector.extract_strided_slice %23 {offsets = [0, 0], sizes = [1, 128], strides = [1, 1]} : vector<8x128xf32> to vector<1x128xf32>
    %c0_17 = arith.constant 0 : index
    %c0_18 = arith.constant 0 : index
    %25 = vector.load %arg7[%c0_17, %c0_18] : memref<1x1xf32, #tpu.memory_space<vmem>>, vector<1x1xf32>
    %26 = vector.broadcast %25 : vector<1x1xf32> to vector<1x128xf32>
    %27 = arith.addf %24, %26 : vector<1x128xf32>
    %cst_19 = arith.constant 5.000000e-01 : f32
    %28 = vector.broadcast %cst_19 : f32 to vector<1x128xf32>
    %29 = arith.mulf %28, %27 : vector<1x128xf32>
    %30 = math.tanh %29 : vector<1x128xf32>
    %cst_20 = arith.constant 1.000000e+00 : f32
    %31 = vector.broadcast %cst_20 : f32 to vector<1x128xf32>
    %32 = arith.addf %30, %31 : vector<1x128xf32>
    %cst_21 = arith.constant 5.000000e-01 : f32
    %33 = vector.broadcast %cst_21 : f32 to vector<1x128xf32>
    %34 = arith.mulf %33, %32 : vector<1x128xf32>
    %c0_22 = arith.constant 0 : index
    %c0_23 = arith.constant 0 : index
    %35 = vector.load %arg8[%c0_22, %c0_23] : memref<1x128xf32, #tpu.memory_space<vmem>>, vector<1x128xf32>
    tpu.vector_store %arg8[%c0_22, %c0_23], %34 {strides = array<i32>} : memref<1x128xf32, #tpu.memory_space<vmem>>, vector<1x128xf32>,
    return
  }
  func.func @transform_0(%arg0: i32) -> (i32, i32) {
    %c0_i32 = arith.constant 0 : i32
    %c0_i32_0 = arith.constant 0 : i32
    return %arg0, %c0_i32 : i32, i32
  }
  func.func @transform_1(%arg0: i32) -> (i32, i32) {
    %c0_i32 = arith.constant 0 : i32
    %c0_i32_0 = arith.constant 0 : i32
    %c0_i32_1 = arith.constant 0 : i32
    return %c0_i32, %c0_i32_0 : i32, i32
  }
  func.func @transform_2(%arg0: i32) -> (i32, i32) {
    %c0_i32 = arith.constant 0 : i32
    %c0_i32_0 = arith.constant 0 : i32
    %c0_i32_1 = arith.constant 0 : i32
    return %c0_i32, %c0_i32_0 : i32, i32
  }
  func.func @transform_3(%arg0: i32) -> (i32, i32) {
    %c0_i32 = arith.constant 0 : i32
    %c0_i32_0 = arith.constant 0 : i32
    %c0_i32_1 = arith.constant 0 : i32
    return %c0_i32, %c0_i32_0 : i32, i32
  }
  func.func @transform_4(%arg0: i32) -> (i32, i32) {
    %c0_i32 = arith.constant 0 : i32
    %c0_i32_0 = arith.constant 0 : i32
    %c0_i32_1 = arith.constant 0 : i32
    return %c0_i32, %c0_i32_0 : i32, i32
  }
  func.func @transform_5(%arg0: i32) -> (i32, i32) {
    %c0_i32 = arith.constant 0 : i32
    %c0_i32_0 = arith.constant 0 : i32
    %c0_i32_1 = arith.constant 0 : i32
    return %c0_i32, %c0_i32_0 : i32, i32
  }
  func.func @transform_6(%arg0: i32) -> (i32, i32) {
    %c0_i32 = arith.constant 0 : i32
    %c0_i32_0 = arith.constant 0 : i32
    %c0_i32_1 = arith.constant 0 : i32
    return %c0_i32, %c0_i32_0 : i32, i32
  }
  func.func @transform_7(%arg0: i32) -> (i32, i32) {
    %c0_i32 = arith.constant 0 : i32
    %c0_i32_0 = arith.constant 0 : i32
    return %c0_i32, %arg0 : i32, i32
  }
}

</mosaic_0001>

<llo_original>
// kernel: pytorch_mlp_forward.1
$region0: #{pytorch_mlp_forward.1}
  #allocation0 [shape = 'u32[]', space=smem, size = 0x4, offset = 0x4, fixed_abs, tag = 'smem constant byte address 0x4 - core index']
  #allocation1 [shape = 'u32[144,128]{1,0:T(1,128)}', space=vmem, size = 0x12000, scoped, tag = 'internal scratch']
  #allocation2 [shape = 'f32[1,1]{1,0:T(1,128)S(1)}', space=vmem, size = 0x200, scoped, tag = 'scoped memory for pytorch_mlp_forward.1']
  %s0 = inlined_call_operand.vmem [shape: f32[128,27], index: 0, kind: input, shape index: {}]
  %s1 = inlined_call_operand.vmem [shape: bf16[50,27], index: 1, kind: input, shape index: {}]
  %s2 = inlined_call_operand.vmem [shape: f32[50,1], index: 2, kind: input, shape index: {}]
  %s3 = inlined_call_operand.vmem [shape: bf16[50,50], index: 3, kind: input, shape index: {}]
  %s4 = inlined_call_operand.vmem [shape: f32[50,1], index: 4, kind: input, shape index: {}]
  %s5 = inlined_call_operand.vmem [shape: f32[8,50], index: 5, kind: input, shape index: {}]
  %s6 = inlined_call_operand.<no memory space> [shape: f32[1,1], index: 6, kind: input, shape index: {}]
  %s7 = inlined_call_operand.vmem [shape: f32[1,128], index: 7, kind: output, shape index: {}]
  %s8 = sld [smem:[#allocation0]]
  $region38: #{pytorch_mlp_forward.1} parent=0
    _
  %s10 = ssub.s32 1, %s8
  %s11 = scalar_select 0, %s10, %s8
  %v12 = vstv %s6
  %13 = vst [vmem:[#allocation2] sm:$0x1] %v12
  // Predicated region
  $region2: #{pytorch_mlp_forward.1} parent=0 // pred_check
    _
  $region3: #{pytorch_mlp_forward.1} parent=0 // pred_check_branch
    %15 = sbr.rel (0) target = $region5
  $region4: #{pytorch_mlp_forward.1} parent=0 // pred_region
    _
  $region5: #{pytorch_mlp_forward.1} parent=0 // pred_fallthru
    _
  // Predicated region
  $region6: #{pytorch_mlp_forward.1} parent=0 // pred_check
    _
  $region7: #{pytorch_mlp_forward.1} parent=0 // pred_check_branch
    %17 = sbr.rel (0) target = $region9
  $region8: #{pytorch_mlp_forward.1} parent=0 // pred_region
    _
  $region9: #{pytorch_mlp_forward.1} parent=0 // pred_fallthru
    _
  // Predicated region
  $region10: #{pytorch_mlp_forward.1} parent=0 // pred_check
    _
  $region11: #{pytorch_mlp_forward.1} parent=0 // pred_check_branch
    %19 = sbr.rel (0) target = $region13
  $region12: #{pytorch_mlp_forward.1} parent=0 // pred_region
    _
  $region13: #{pytorch_mlp_forward.1} parent=0 // pred_fallthru
    _
  // Predicated region
  $region14: #{pytorch_mlp_forward.1} parent=0 // pred_check
    _
  $region15: #{pytorch_mlp_forward.1} parent=0 // pred_check_branch
    %21 = sbr.rel (0) target = $region17
  $region16: #{pytorch_mlp_forward.1} parent=0 // pred_region
    _
  $region17: #{pytorch_mlp_forward.1} parent=0 // pred_fallthru
    _
  // Predicated region
  $region18: #{pytorch_mlp_forward.1} parent=0 // pred_check
    _
  $region19: #{pytorch_mlp_forward.1} parent=0 // pred_check_branch
    %23 = sbr.rel (0) target = $region21
  $region20: #{pytorch_mlp_forward.1} parent=0 // pred_region
    _
  $region21: #{pytorch_mlp_forward.1} parent=0 // pred_fallthru
    _
  // Predicated region
  $region22: #{pytorch_mlp_forward.1} parent=0 // pred_check
    _
  $region23: #{pytorch_mlp_forward.1} parent=0 // pred_check_branch
    %25 = sbr.rel (0) target = $region25
  $region24: #{pytorch_mlp_forward.1} parent=0 // pred_region
    _
  $region25: #{pytorch_mlp_forward.1} parent=0 // pred_fallthru
    _
  // Predicated region
  $region26: #{pytorch_mlp_forward.1} parent=0 // pred_check
    _
  $region27: #{pytorch_mlp_forward.1} parent=0 // pred_check_branch
    %27 = sbr.rel (0) target = $region29
  $region28: #{pytorch_mlp_forward.1} parent=0 // pred_region
    _
  $region29: #{pytorch_mlp_forward.1} parent=0 // pred_fallthru
    _
  %v29 = vld [vmem:[%s0] sm:$0xff]
  %v30 = vld [vmem:[%s0 + $0x8] sm:$0xff]
  %v31 = vld [vmem:[%s0 + $0x10] sm:$0xff]
  %v32 = vld [vmem:[%s0 + $0x18] sm:$0xff]
  %v33 = vld [vmem:[%s0 + $0x20] sm:$0xff]
  %v34 = vld [vmem:[%s0 + $0x28] sm:$0xff]
  %v35 = vld [vmem:[%s0 + $0x30] sm:$0xff]
  %v36 = vld [vmem:[%s0 + $0x38] sm:$0xff]
  %v37 = vld [vmem:[%s0 + $0x40] sm:$0xff]
  %v38 = vld [vmem:[%s0 + $0x48] sm:$0xff]
  %v39 = vld [vmem:[%s0 + $0x50] sm:$0xff]
  %v40 = vld [vmem:[%s0 + $0x58] sm:$0xff]
  %v41 = vld [vmem:[%s0 + $0x60] sm:$0xff]
  %v42 = vld [vmem:[%s0 + $0x68] sm:$0xff]
  %v43 = vld [vmem:[%s0 + $0x70] sm:$0xff]
  %v44 = vld [vmem:[%s0 + $0x78] sm:$0xff]
  %v45 = vpack.c.bf16 %v30, %v29
  %v46 = vpack.c.bf16 %v32, %v31
  %v47 = vpack.c.bf16 %v34, %v33
  %v48 = vpack.c.bf16 %v36, %v35
  %v49 = vpack.c.bf16 %v38, %v37
  %v50 = vpack.c.bf16 %v40, %v39
  %v51 = vpack.c.bf16 %v42, %v41
  %v52 = vpack.c.bf16 %v44, %v43
  %v53 = vld [vmem:[%s1] sm:$0xf]
  %v54 = vld [vmem:[%s1 + $0x4] sm:$0xf]
  %v55 = vld [vmem:[%s1 + $0x8] sm:$0xf]
  %v56 = vld [vmem:[%s1 + $0xc] sm:$0xf]
  %v57 = vld [vmem:[%s1 + $0x10] sm:$0xf]
  %v58 = vld [vmem:[%s1 + $0x14] sm:$0xf]
  %v59 = vld [vmem:[%s1 + $0x18] sm:$0x1]
  %v60 = vld [vmem:[%s2] sm:$0xff]
  %v61 = vld [vmem:[%s2 + $0x8] sm:$0xff]
  %v62 = vld [vmem:[%s2 + $0x10] sm:$0xff]
  %v63 = vld [vmem:[%s2 + $0x18] sm:$0xff]
  %v64 = vld [vmem:[%s2 + $0x20] sm:$0xff]
  %v65 = vld [vmem:[%s2 + $0x28] sm:$0xff]
  %v66 = vld [vmem:[%s2 + $0x30] sm:$0x3]
  %68 = vset.pattern.permute.xlu0 0
  %69 = vperm.xlu0 %68, %v60
  %v70 = vpop.permute.xlu0 %69
  %73 = vset.pattern.permute.xlu0 0
  %74 = vperm.xlu0 %73, %v61
  %v75 = vpop.permute.xlu0 %74
  %78 = vset.pattern.permute.xlu0 0
  %79 = vperm.xlu0 %78, %v62
  %v80 = vpop.permute.xlu0 %79
  %83 = vset.pattern.permute.xlu0 0
  %84 = vperm.xlu0 %83, %v63
  %v85 = vpop.permute.xlu0 %84
  %88 = vset.pattern.permute.xlu0 0
  %89 = vperm.xlu0 %88, %v64
  %v90 = vpop.permute.xlu0 %89
  %93 = vset.pattern.permute.xlu0 0
  %94 = vperm.xlu0 %93, %v65
  %v95 = vpop.permute.xlu0 %94
  %98 = vset.pattern.permute.xlu0 0
  %99 = vperm.xlu0 %98, %v66
  %v100 = vpop.permute.xlu0 %99
  %v109 = vunpack.c.l.b16 %v53
  %v110 = vunpack.c.l.b16 %v54
  %v111 = vunpack.c.l.b16 %v55
  %v112 = vunpack.c.l.b16 %v56
  %v113 = vunpack.c.l.b16 %v57
  %v114 = vunpack.c.l.b16 %v58
  %v115 = vunpack.c.l.b16 %v59
  %v116 = vpack.c.b16 %v110, %v109
  %v117 = vpack.c.b16 %v112, %v111
  %v118 = vpack.c.b16 %v114, %v113
  %v119 = vpack.c.b16 %v115, %v115
  %vm120 = vcmask 220160
  %v122 = vsel %vm120, %v116, 0
  %v125 = vsel %vm120, %v117, 0
  %v128 = vsel %vm120, %v118, 0
  %v131 = vsel %vm120, %v119, 0
  %v134 = vsel %vm120, %v45, 0
  %v137 = vsel %vm120, %v46, 0
  %v140 = vsel %vm120, %v47, 0
  %v143 = vsel %vm120, %v48, 0
  %v146 = vsel %vm120, %v49, 0
  %v149 = vsel %vm120, %v50, 0
  %v152 = vsel %vm120, %v51, 0
  %v155 = vsel %vm120, %v52, 0
  %157 = vmatprep.subr.bf16.mxu0 0
  %158 = vmatpush1.bf16.xpose.msra.mxu0 %v134
  %159 = vmatprep.subr.bf16.mxu0 0
  %160 = vmatpush1.bf16.xpose.msra.mxu0 %v137
  %161 = vmatprep.subr.bf16.mxu0 0
  %162 = vmatpush1.bf16.xpose.msra.mxu0 %v140
  %163 = vmatprep.subr.bf16.mxu0 0
  %164 = vmatpush1.bf16.xpose.msra.mxu0 %v143
  %165 = vmatprep.subr.bf16.mxu0 0
  %166 = vmatpush1.bf16.xpose.msra.mxu0 %v146
  %167 = vmatprep.subr.bf16.mxu0 0
  %168 = vmatpush1.bf16.xpose.msra.mxu0 %v149
  %169 = vmatprep.subr.bf16.mxu0 0
  %170 = vmatpush1.bf16.xpose.msra.mxu0 %v152
  %171 = vmatprep.subr.bf16.mxu0 0
  %172 = vmatpush1.bf16.xpose.msra.mxu0 %v155
  %173 = vmatprep.subr.bf16.mxu0 0
  %174 = vmatpush1.bf16.xpose.msra.mxu0 0
  %175 = vmatprep.subr.bf16.mxu0 0
  %176 = vmatpush1.bf16.xpose.msra.mxu0 0
  %177 = vmatprep.subr.bf16.mxu0 0
  %178 = vmatpush1.bf16.xpose.msra.mxu0 0
  %179 = vmatprep.subr.bf16.mxu0 0
  %180 = vmatpush1.bf16.xpose.msra.mxu0 0
  %181 = vmatprep.subr.bf16.mxu0 0
  %182 = vmatpush1.bf16.xpose.msra.mxu0 0
  %183 = vmatprep.subr.bf16.mxu0 0
  %184 = vmatpush1.bf16.xpose.msra.mxu0 0
  %185 = vmatprep.subr.bf16.mxu0 0
  %186 = vmatpush1.bf16.xpose.msra.mxu0 0
  %187 = vmatprep.subr.bf16.mxu0 0
  %188 = vmatpush1.bf16.xpose.msra.mxu0 0
  %189 = vmatprep.mubr.bf16.mxu0 0
  %190 = vmatmul.mubr.bf16.gmra.mrb[0].mxu0 %v122
  %v191 = vpop.f32.mrb[0].mxu0
  %v192 = vadd.f32 %v70, %v191
  %v193 = vpop.f32.mrb[0].mxu0
  %v194 = vpop.f32.mrb[0].mxu0
  %v195 = vadd.f32 %v75, %v194
  %v196 = vpop.f32.mrb[0].mxu0
  %197 = vmatprep.mubr.bf16.mxu0 0
  %198 = vmatmul.mubr.bf16.gmra.mrb[0].mxu0 %v125
  %v199 = vpop.f32.mrb[0].mxu0
  %v200 = vadd.f32 %v80, %v199
  %v201 = vpop.f32.mrb[0].mxu0
  %v202 = vpop.f32.mrb[0].mxu0
  %v203 = vadd.f32 %v85, %v202
  %v204 = vpop.f32.mrb[0].mxu0
  %205 = vmatprep.mubr.bf16.mxu0 0
  %206 = vmatmul.mubr.bf16.gmra.mrb[0].mxu0 %v128
  %v207 = vpop.f32.mrb[0].mxu0
  %v208 = vadd.f32 %v90, %v207
  %v209 = vpop.f32.mrb[0].mxu0
  %v210 = vpop.f32.mrb[0].mxu0
  %v211 = vadd.f32 %v95, %v210
  %v212 = vpop.f32.mrb[0].mxu0
  %213 = vmatprep.mubr.bf16.mxu0 0
  %214 = vmatmul.mubr.bf16.gmra.mrb[0].mxu0 %v131
  %v215 = vpop.f32.mrb[0].mxu0
  %v216 = vadd.f32 %v100, %v215
  %v217 = vpop.f32.mrb[0].mxu0
  %v218 = vpop.f32.mrb[0].mxu0
  %v219 = vpop.f32.mrb[0].mxu0
  %220 = vdwg.mxu0
  %v221 = vmul.f32 %v192, 0.5
  %v222 = vmul.f32 %v195, 0.5
  %v223 = vmul.f32 %v200, 0.5
  %v224 = vmul.f32 %v203, 0.5
  %v225 = vmul.f32 %v208, 0.5
  %v226 = vmul.f32 %v211, 0.5
  %v227 = vmul.f32 %v216, 0.5
  %v228 = vtanh.pop %v221
  %v229 = vtanh.pop %v222
  %v230 = vtanh.pop %v223
  %v231 = vtanh.pop %v224
  %v232 = vtanh.pop %v225
  %v233 = vtanh.pop %v226
  %v234 = vtanh.pop %v227
  %v235 = vadd.f32 %v228, 1.0
  %v236 = vadd.f32 %v229, 1.0
  %v237 = vadd.f32 %v230, 1.0
  %v238 = vadd.f32 %v231, 1.0
  %v239 = vadd.f32 %v232, 1.0
  %v240 = vadd.f32 %v233, 1.0
  %v241 = vadd.f32 %v234, 1.0
  %v242 = vmul.f32 %v235, 0.5
  %v243 = vmul.f32 %v236, 0.5
  %v244 = vmul.f32 %v237, 0.5
  %v245 = vmul.f32 %v238, 0.5
  %v246 = vmul.f32 %v239, 0.5
  %v247 = vmul.f32 %v240, 0.5
  %v248 = vmul.f32 %v241, 0.5
  %v249 = vld [vmem:[%s3] sm:$0xf]
  %v250 = vld [vmem:[%s3 + $0x4] sm:$0xf]
  %v251 = vld [vmem:[%s3 + $0x8] sm:$0xf]
  %v252 = vld [vmem:[%s3 + $0xc] sm:$0xf]
  %v253 = vld [vmem:[%s3 + $0x10] sm:$0xf]
  %v254 = vld [vmem:[%s3 + $0x14] sm:$0xf]
  %v255 = vld [vmem:[%s3 + $0x18] sm:$0x1]
  %v256 = vpack.c.bf16 %v243, %v242
  %v257 = vpack.c.bf16 %v245, %v244
  %v258 = vpack.c.bf16 %v247, %v246
  %v259 = vpack.c.bf16 %v248, %v248
  %v260 = vld [vmem:[%s4] sm:$0xff]
  %v261 = vld [vmem:[%s4 + $0x8] sm:$0xff]
  %v262 = vld [vmem:[%s4 + $0x10] sm:$0xff]
  %v263 = vld [vmem:[%s4 + $0x18] sm:$0xff]
  %v264 = vld [vmem:[%s4 + $0x20] sm:$0xff]
  %v265 = vld [vmem:[%s4 + $0x28] sm:$0xff]
  %v266 = vld [vmem:[%s4 + $0x30] sm:$0x3]
  %268 = vset.pattern.permute.xlu0 0
  %269 = vperm.xlu0 %268, %v260
  %v270 = vpop.permute.xlu0 %269
  %273 = vset.pattern.permute.xlu0 0
  %274 = vperm.xlu0 %273, %v261
  %v275 = vpop.permute.xlu0 %274
  %278 = vset.pattern.permute.xlu0 0
  %279 = vperm.xlu0 %278, %v262
  %v280 = vpop.permute.xlu0 %279
  %283 = vset.pattern.permute.xlu0 0
  %284 = vperm.xlu0 %283, %v263
  %v285 = vpop.permute.xlu0 %284
  %288 = vset.pattern.permute.xlu0 0
  %289 = vperm.xlu0 %288, %v264
  %v290 = vpop.permute.xlu0 %289
  %293 = vset.pattern.permute.xlu0 0
  %294 = vperm.xlu0 %293, %v265
  %v295 = vpop.permute.xlu0 %294
  %298 = vset.pattern.permute.xlu0 0
  %299 = vperm.xlu0 %298, %v266
  %v300 = vpop.permute.xlu0 %299
  %v309 = vunpack.c.l.b16 %v249
  %v310 = vunpack.c.l.b16 %v250
  %v311 = vunpack.c.l.b16 %v251
  %v312 = vunpack.c.l.b16 %v252
  %v313 = vunpack.c.l.b16 %v253
  %v314 = vunpack.c.l.b16 %v254
  %v315 = vunpack.c.l.b16 %v255
  %v316 = vpack.c.b16 %v310, %v309
  %v317 = vpack.c.b16 %v312, %v311
  %v318 = vpack.c.b16 %v314, %v313
  %v319 = vpack.c.b16 %v315, %v315
  %vm320 = vcmask 408576
  %v322 = vsel %vm320, %v316, 0
  %v325 = vsel %vm320, %v317, 0
  %v328 = vsel %vm320, %v318, 0
  %v331 = vsel %vm320, %v319, 0
  %vm333 = vcmask 1040384
  %v335 = vsel %vm333, %v259, 0
  %337 = vmatprep.subr.bf16.mxu0 0
  %338 = vmatpush1.bf16.msra.mxu0 %v256
  %339 = vmatprep.subr.bf16.mxu0 0
  %340 = vmatpush1.bf16.msra.mxu0 %v257
  %341 = vmatprep.subr.bf16.mxu0 0
  %342 = vmatpush1.bf16.msra.mxu0 %v258
  %343 = vmatprep.subr.bf16.mxu0 0
  %344 = vmatpush1.bf16.msra.mxu0 %v335
  %345 = vmatprep.subr.bf16.mxu0 0
  %346 = vmatpush1.bf16.msra.mxu0 0
  %347 = vmatprep.subr.bf16.mxu0 0
  %348 = vmatpush1.bf16.msra.mxu0 0
  %349 = vmatprep.subr.bf16.mxu0 0
  %350 = vmatpush1.bf16.msra.mxu0 0
  %351 = vmatprep.subr.bf16.mxu0 0
  %352 = vmatpush1.bf16.msra.mxu0 0
  %353 = vmatprep.subr.bf16.mxu0 0
  %354 = vmatpush1.bf16.msra.mxu0 0
  %355 = vmatprep.subr.bf16.mxu0 0
  %356 = vmatpush1.bf16.msra.mxu0 0
  %357 = vmatprep.subr.bf16.mxu0 0
  %358 = vmatpush1.bf16.msra.mxu0 0
  %359 = vmatprep.subr.bf16.mxu0 0
  %360 = vmatpush1.bf16.msra.mxu0 0
  %361 = vmatprep.subr.bf16.mxu0 0
  %362 = vmatpush1.bf16.msra.mxu0 0
  %363 = vmatprep.subr.bf16.mxu0 0
  %364 = vmatpush1.bf16.msra.mxu0 0
  %365 = vmatprep.subr.bf16.mxu0 0
  %366 = vmatpush1.bf16.msra.mxu0 0
  %367 = vmatprep.subr.bf16.mxu0 0
  %368 = vmatpush1.bf16.msra.mxu0 0
  %369 = vmatprep.mubr.bf16.mxu0 0
  %370 = vmatmul.mubr.bf16.gmra.mrb[0].mxu0 %v322
  %v371 = vpop.f32.mrb[0].mxu0
  %v372 = vadd.f32 %v270, %v371
  %v373 = vpop.f32.mrb[0].mxu0
  %v374 = vpop.f32.mrb[0].mxu0
  %v375 = vadd.f32 %v275, %v374
  %v376 = vpop.f32.mrb[0].mxu0
  %377 = vmatprep.mubr.bf16.mxu0 0
  %378 = vmatmul.mubr.bf16.gmra.mrb[0].mxu0 %v325
  %v379 = vpop.f32.mrb[0].mxu0
  %v380 = vadd.f32 %v280, %v379
  %v381 = vpop.f32.mrb[0].mxu0
  %v382 = vpop.f32.mrb[0].mxu0
  %v383 = vadd.f32 %v285, %v382
  %v384 = vpop.f32.mrb[0].mxu0
  %385 = vmatprep.mubr.bf16.mxu0 0
  %386 = vmatmul.mubr.bf16.gmra.mrb[0].mxu0 %v328
  %v387 = vpop.f32.mrb[0].mxu0
  %v388 = vadd.f32 %v290, %v387
  %v389 = vpop.f32.mrb[0].mxu0
  %v390 = vpop.f32.mrb[0].mxu0
  %v391 = vadd.f32 %v295, %v390
  %v392 = vpop.f32.mrb[0].mxu0
  %393 = vmatprep.mubr.bf16.mxu0 0
  %394 = vmatmul.mubr.bf16.gmra.mrb[0].mxu0 %v331
  %v395 = vpop.f32.mrb[0].mxu0
  %v396 = vadd.f32 %v300, %v395
  %v397 = vpop.f32.mrb[0].mxu0
  %v398 = vpop.f32.mrb[0].mxu0
  %v399 = vpop.f32.mrb[0].mxu0
  %400 = vdwg.mxu0
  %v401 = vmax.f32 %v372, 0.0
  %v402 = vmax.f32 %v375, 0.0
  %v403 = vmax.f32 %v380, 0.0
  %v404 = vmax.f32 %v383, 0.0
  %v405 = vmax.f32 %v388, 0.0
  %v406 = vmax.f32 %v391, 0.0
  %v407 = vmax.f32 %v396, 0.0
  %v408 = vld [vmem:[%s5] sm:$0xff]
  %v410 = vsel %vm320, %v408, 0
  %vm412 = vcmask 1041408
  %v414 = vsel %vm412, %v407, 0
  %416 = vmatprep.subr.mxu0 0.0
  %417 = vmatpush1.msra.mxu0 %v401
  %418 = vmatprep.subr.mxu0 0.0
  %419 = vmatpush1.msra.mxu0 %v402
  %420 = vmatprep.subr.mxu0 0.0
  %421 = vmatpush1.msra.mxu0 %v403
  %422 = vmatprep.subr.mxu0 0.0
  %423 = vmatpush1.msra.mxu0 %v404
  %424 = vmatprep.subr.mxu0 0.0
  %425 = vmatpush1.msra.mxu0 %v405
  %426 = vmatprep.subr.mxu0 0.0
  %427 = vmatpush1.msra.mxu0 %v406
  %428 = vmatprep.subr.mxu0 0.0
  %429 = vmatpush1.msra.mxu0 %v414
  %430 = vmatprep.subr.mxu0 0.0
  %431 = vmatpush1.msra.mxu0 0.0
  %432 = vmatprep.subr.mxu0 0.0
  %433 = vmatpush1.msra.mxu0 0.0
  %434 = vmatprep.subr.mxu0 0.0
  %435 = vmatpush1.msra.mxu0 0.0
  %436 = vmatprep.subr.mxu0 0.0
  %437 = vmatpush1.msra.mxu0 0.0
  %438 = vmatprep.subr.mxu0 0.0
  %439 = vmatpush1.msra.mxu0 0.0
  %440 = vmatprep.subr.mxu0 0.0
  %441 = vmatpush1.msra.mxu0 0.0
  %442 = vmatprep.subr.mxu0 0.0
  %443 = vmatpush1.msra.mxu0 0.0
  %444 = vmatprep.subr.mxu0 0.0
  %445 = vmatpush1.msra.mxu0 0.0
  %446 = vmatprep.subr.mxu0 0.0
  %447 = vmatpush1.msra.mxu0 0.0
  %448 = vmatprep.subr.mxu0 0.0
  %449 = vmatpush1.msra.mxu0 0.0
  %450 = vmatprep.subr.mxu0 0.0
  %451 = vmatpush1.msra.mxu0 0.0
  %452 = vmatprep.subr.mxu0 0.0
  %453 = vmatpush1.msra.mxu0 0.0
  %454 = vmatprep.subr.mxu0 0.0
  %455 = vmatpush1.msra.mxu0 0.0
  %456 = vmatprep.subr.mxu0 0.0
  %457 = vmatpush1.msra.mxu0 0.0
  %458 = vmatprep.subr.mxu0 0.0
  %459 = vmatpush1.msra.mxu0 0.0
  %460 = vmatprep.subr.mxu0 0.0
  %461 = vmatpush1.msra.mxu0 0.0
  %462 = vmatprep.subr.mxu0 0.0
  %463 = vmatpush1.msra.mxu0 0.0
  %464 = vmatprep.subr.mxu0 0.0
  %465 = vmatpush1.msra.mxu0 0.0
  %466 = vmatprep.subr.mxu0 0.0
  %467 = vmatpush1.msra.mxu0 0.0
  %468 = vmatprep.subr.mxu0 0.0
  %469 = vmatpush1.msra.mxu0 0.0
  %470 = vmatprep.subr.mxu0 0.0
  %471 = vmatpush1.msra.mxu0 0.0
  %472 = vmatprep.subr.mxu0 0.0
  %473 = vmatpush1.msra.mxu0 0.0
  %474 = vmatprep.subr.mxu0 0.0
  %475 = vmatpush1.msra.mxu0 0.0
  %476 = vmatprep.subr.mxu0 0.0
  %477 = vmatpush1.msra.mxu0 0.0
  %478 = vmatprep.subr.mxu0 0.0
  %479 = vmatpush1.msra.mxu0 0.0
  %480 = vmatprep.mubr.f32.mxu0 0.0
  %481 = vmatmul.mubr.f32.gmra.mrb[0].mxu0 %v410
  %v482 = vpop.f32.mrb[0].mxu0
  %v483 = vadd.f32 0.0, %v482
  %v484 = vpop.f32.mrb[0].mxu0
  %485 = vdwg.mxu0
  %v486 = vld [vmem:[#allocation2] sm:$0x1]
  %488 = vset.pattern.permute.xlu0 0
  %489 = vperm.xlu0 %488, %v486
  %v490 = vpop.permute.xlu0 %489
  %v492 = vlaneseq
  %v493 = vshrl.u32 %v492, 7
  %v494 = vsub.s32 0, %v493
  %v495 = vrot.slane %v490, %v494
  %v496 = vadd.f32 %v483, %v495
  %v497 = vmul.f32 %v496, 0.5
  %v498 = vtanh.pop %v497
  %v499 = vadd.f32 %v498, 1.0
  %v500 = vmul.f32 %v499, 0.5
  %501 = vst [vmem:[%s7] sm:$0x1] %v500
  // Predicated region
  $region30: #{pytorch_mlp_forward.1} parent=0 // pred_check
    _
  $region31: #{pytorch_mlp_forward.1} parent=0 // pred_check_branch
    %503 = sbr.rel (0) target = $region33
  $region32: #{pytorch_mlp_forward.1} parent=0 // pred_region
    _
  $region33: #{pytorch_mlp_forward.1} parent=0 // pred_fallthru
    _
  // Predicated region
  $region34: #{pytorch_mlp_forward.1} parent=0 // pred_check
    _
  $region35: #{pytorch_mlp_forward.1} parent=0 // pred_check_branch
    %505 = sbr.rel (0) target = $region37
  $region36: #{pytorch_mlp_forward.1} parent=0 // pred_region
    _
  $region37: #{pytorch_mlp_forward.1} parent=0 // pred_fallthru
    _

</llo_original>
